<compile_context>
chip_gen: v7x
topology: tpu7x:2x2x1
jax: 0.10.0
libtpu: 0.0.40
codegen_flags: <defaults>
</compile_context>

<pallas_src>
import functools

import jax
import jax.numpy as jnp
from jax import lax
from jax.experimental import pallas as pl
from jax.experimental.pallas import tpu as pltpu


# ------------------------------ RGBD2RGB ------------------------------------

def _rgbd2rgb_kernel(w_ref, x_ref, o_ref):
    # w_ref: (3, 4) f32 in SMEM (read as scalars).
    # x_ref: (4, r_tile, lane) VMEM.   o_ref: (3, r_tile, lane) VMEM.
    x0 = x_ref[0]
    x1 = x_ref[1]
    x2 = x_ref[2]
    x3 = x_ref[3]
    for o in range(3):  # unrolled at trace time: 12 mul + 9 add per pixel (VPU)
        mixed = (w_ref[o, 0] * x0 + w_ref[o, 1] * x1
                 + w_ref[o, 2] * x2 + w_ref[o, 3] * x3)
        o_ref[o] = mixed.astype(o_ref.dtype)


_MIN_GRID_STEPS = 4  # >= 2 steps per TensorCore on megacore parts (v7x)


def _largest_divisor_multiple(dim, unit, cap):
    """Largest multiple of `unit` that divides `dim` and is <= cap (>= unit)."""
    best = unit
    t = unit
    limit = min(dim, max(cap, unit))
    while t <= limit:
        if dim % t == 0:
            best = t
        t += unit
    return best


def _rgbd_budget():
    """Return (target f32 elems per channel slab, vmem_limit_bytes or None)."""
    try:
        info = pltpu.get_tpu_info()
        cap = getattr(info, "vmem_capacity_bytes", None)
    except Exception:  # interpret mode / unknown target
        cap = None
    if cap is None:
        # Unknown chip: stay under v5e's 16 MiB default scoped-VMEM limit
        # (double-buffered footprint ~= 2 * (4+3) * 192K * 4B ~= 10.5 MiB).
        return 192 * 1024, None
    if cap >= 96 * (1 << 20):
        # v5e / v6e: 128 MiB physical VMEM -> raise the scoped limit and use
        # ~2 MB per-channel slabs (2*(4+3)*512K*4B ~= 28 MiB double-buffered).
        return 512 * 1024, 64 << 20
    # v7x: 64 MiB physical per TensorCore -> same slab, tighter limit w/ headroom.
    return 512 * 1024, 48 << 20


def _plan_rgbd_tiling(n, h, w, target_elems):
    """Return (rows, lane, r_tile); x is viewed as (N, 4, rows, lane)."""
    hw = h * w
    lane = None
    if hw % 128 == 0:
        # Lane-dense flattening of (H, W): prefer a lane width that also makes
        # the row count a multiple of 8 (full sublane occupancy).
        for cand in (512, 256, 128):
            if hw % (cand * 8) == 0:
                lane = cand
                break
        if lane is None:
            for cand in (512, 256, 128):
                if hw % cand == 0:
                    lane = cand
                    break
    if lane is None:
        # TODO(synk): H*W not a multiple of 128 -- fall back to full-W rows
        # (correct but lane-sparse); padding to a lane multiple would cost an
        # extra HBM round-trip on this purely memory-bound op.
        lane, rows = w, h
    else:
        rows = hw // lane
    if rows % 8 == 0:
        max_rows = max(8, (target_elems // lane) // 8 * 8)
        r_tile = _largest_divisor_multiple(rows, 8, max_rows)
    else:
        r_tile = rows  # full extent is always legal
    # Megacore: keep >= _MIN_GRID_STEPS total grid steps (>= 2 per core) so
    # each core keeps prefetch/writeback overlap.  Halving a divisor of `rows`
    # keeps divisibility; stop at a multiple of 8.
    while n * (rows // r_tile) < _MIN_GRID_STEPS and r_tile % 16 == 0:
        r_tile //= 2
    return rows, lane, r_tile


def rgbd2rgb(x, weight, *, out_dtype=None):
    """x: (N, 4, H, W) f32, weight: (3, 4) f32 -> (N, 3, H, W) out_dtype."""
    n, c_in, h, w = x.shape
    assert c_in == 4 and weight.shape == (3, 4)
    out_dtype = jnp.dtype(out_dtype) if out_dtype is not None else x.dtype

    target_elems, vmem_limit = _rgbd_budget()
    rows, lane, r_tile = _plan_rgbd_tiling(n, h, w, target_elems)
    x4 = x.reshape(n, 4, rows, lane)  # free: trailing-dim collapse / split
    grid = (n, rows // r_tile)

    out4 = pl.pallas_call(
        _rgbd2rgb_kernel,
        out_shape=jax.ShapeDtypeStruct((n, 3, rows, lane), out_dtype),
        grid=grid,
        in_specs=[
            # tiny weight: whole array in SMEM, same ref for every grid step
            pl.BlockSpec(memory_space=pltpu.MemorySpace.SMEM),
            # x: one batch element, all 4 channels, one dense (r_tile, lane) slab
            pl.BlockSpec((None, 4, r_tile, lane), lambda b, ri: (b, 0, ri, 0)),
        ],
        out_specs=pl.BlockSpec((None, 3, r_tile, lane),
                               lambda b, ri: (b, 0, ri, 0)),
        compiler_params=pltpu.CompilerParams(
            dimension_semantics=("parallel", "parallel"),
            vmem_limit_bytes=vmem_limit),
        cost_estimate=pl.CostEstimate(
            flops=21 * n * h * w,  # 12 mul + 9 add per pixel
            transcendentals=0,
            bytes_accessed=(4 * x.dtype.itemsize
                            + 3 * out_dtype.itemsize) * n * h * w),
    )(weight, x4)
    return out4.reshape(n, 3, h, w)


def make_rgbd2rgb_weight():
    """Deterministic init matching the PyTorch module: identity RGB, 0.1 depth."""
    w = jnp.zeros((3, 4), dtype=jnp.float32)
    w = w.at[0, 0].set(1.0).at[1, 1].set(1.0).at[2, 2].set(1.0)
    w = w.at[:, 3].set(0.1)
    return w  # PyTorch conv.weight (3, 4, 1, 1) squeezed


# ------------------------------- GPSHead ------------------------------------

def _gps_head_kernel(x_ref, w1_ref, b1_ref, w2_ref, b2_ref, o_ref, acc_ref, *,
                     inv_count):
    # x_ref: (B, C, chunk) lane-dense HW slice.  acc_ref: (B, C) f32 scratch.
    step = pl.program_id(0)

    @pl.when(step == 0)
    def _():
        acc_ref[...] = jnp.zeros_like(acc_ref)

    # Partial global-average-pool: cross-lane reduction over this HW chunk.
    acc_ref[...] += jnp.sum(x_ref[...], axis=2)

    @pl.when(step == pl.num_programs(0) - 1)
    def _():
        pooled = acc_ref[...] * inv_count                              # (B, C)
        # NOTE: tiny-M GEMMs (M = batch) waste the MXU; fine for this head,
        # do not copy this shape into anything hot.
        hid = jnp.dot(pooled, w1_ref[...],
                      preferred_element_type=jnp.float32,
                      precision=lax.Precision.HIGHEST) + b1_ref[...]
        hid = jnp.maximum(hid, 0.0)                                    # ReLU
        logits = jnp.dot(hid, w2_ref[...],
                         preferred_element_type=jnp.float32,
                         precision=lax.Precision.HIGHEST) + b2_ref[...]
        o_ref[...] = (1.0 / (1.0 + jnp.exp(-logits))).astype(o_ref.dtype)


def _pick_gap_chunk(hw, b, c, target_bytes=2 << 20):
    """Lane-dense HW chunk size: multiple of 128 dividing hw, ~target_bytes."""
    if hw % 128 != 0:
        return hw  # full extent is legal; rare for real feature maps
    max_elems = max(128, (target_bytes // (4 * b * c)) // 128 * 128)
    chunk = _largest_divisor_multiple(hw, 128, max_elems)
    # Prefer >= 2 grid steps so the accumulation loop actually pipelines.
    while hw // chunk < 2 and chunk % 256 == 0:
        chunk //= 2
    return chunk


def gps_head(feat, w1, b1, w2, b2):
    """feat: (B, C, H, W); w1: (C, Hd); b1: (1, Hd); w2: (Hd, 2); b2: (1, 2)."""
    assert feat.ndim == 4
    b, c, h, w = feat.shape
    hw = h * w
    feat2 = feat.reshape(b, c, hw)  # free trailing-dim collapse -> lane-dense
    chunk = _pick_gap_chunk(hw, b, c)
    grid = (hw // chunk,)
    kernel = functools.partial(_gps_head_kernel, inv_count=1.0 / hw)
    return pl.pallas_call(
        kernel,
        out_shape=jax.ShapeDtypeStruct((b, 2), jnp.float32),
        grid=grid,
        in_specs=[
            pl.BlockSpec((b, c, chunk), lambda i: (0, 0, i)),
            pl.BlockSpec(w1.shape, lambda i: (0, 0)),
            pl.BlockSpec(b1.shape, lambda i: (0, 0)),
            pl.BlockSpec(w2.shape, lambda i: (0, 0)),
            pl.BlockSpec(b2.shape, lambda i: (0, 0)),
        ],
        out_specs=pl.BlockSpec((b, 2), lambda i: (0, 0)),
        scratch_shapes=[pltpu.VMEM((b, c), jnp.float32)],
        compiler_params=pltpu.CompilerParams(
            dimension_semantics=("arbitrary",)),
    )(feat2, w1, b1, w2, b2)


# --------------------------------- main --------------------------------------

if __name__ == "__main__":
    key = jax.random.PRNGKey(0)
    k_rgbd, k_odd, k_feat, k_w1, k_w2 = jax.random.split(key, 5)

    conv_w = make_rgbd2rgb_weight()

    # --- RGBD2RGB adapter, lane-dense flattened path: (2,4,16,16) -> (2,3,16,16)
    rgbd = jax.random.normal(k_rgbd, (2, 4, 16, 16), dtype=jnp.float32)
    adapted = jax.block_until_ready(rgbd2rgb(rgbd, conv_w))
    ref = jnp.einsum("oc,nchw->nohw", conv_w, rgbd,
                     precision=lax.Precision.HIGHEST)
    assert adapted.shape == (2, 3, 16, 16)
    assert jnp.allclose(adapted, ref, atol=1e-5, rtol=1e-5)

    # Optional bf16 output path (cuts HBM write traffic on the real model).
    adapted_bf16 = jax.block_until_ready(
        rgbd2rgb(rgbd, conv_w, out_dtype=jnp.bfloat16))
    assert adapted_bf16.dtype == jnp.bfloat16
    assert jnp.allclose(adapted_bf16.astype(jnp.float32), ref,
                        atol=3e-2, rtol=3e-2)

    # Fallback path: H*W not a multiple of 128 (full-W rows, still correct).
    rgbd_odd = jax.random.normal(k_odd, (1, 4, 8, 12), dtype=jnp.float32)
    adapted_odd = jax.block_until_ready(rgbd2rgb(rgbd_odd, conv_w))
    ref_odd = jnp.einsum("oc,nchw->nohw", conv_w, rgbd_odd,
                         precision=lax.Precision.HIGHEST)
    assert jnp.allclose(adapted_odd, ref_odd, atol=1e-5, rtol=1e-5)

    # --- GPSHead on stand-in backbone features: (2,32,16,16) -> (2,2)
    # TODO(synk): the real `first_pred` comes from the ultralytics YOLOv8
    # backbone (with the ThermalProcessor fusion pre-hook at layer 6); neither
    # has a standalone Pallas equivalent, so a random feature map stands in.
    feat = jax.random.normal(k_feat, (2, 32, 16, 16), dtype=jnp.float32)
    hidden = 128
    w1 = 0.1 * jax.random.normal(k_w1, (32, hidden), dtype=jnp.float32)
    b1 = jnp.zeros((1, hidden), dtype=jnp.float32)
    w2 = 0.1 * jax.random.normal(k_w2, (hidden, 2), dtype=jnp.float32)
    b2 = jnp.zeros((1, 2), dtype=jnp.float32)
    gps = jax.block_until_ready(gps_head(feat, w1, b1, w2, b2))

    pooled_ref = feat.mean(axis=(2, 3))
    hid_ref = jnp.maximum(
        jnp.dot(pooled_ref, w1, precision=lax.Precision.HIGHEST) + b1, 0.0)
    gps_ref = 1.0 / (1.0 + jnp.exp(
        -(jnp.dot(hid_ref, w2, precision=lax.Precision.HIGHEST) + b2)))
    assert gps.shape == (2, 2)
    assert jnp.allclose(gps, gps_ref, atol=1e-5, rtol=1e-5)

    print("KERNEL_OK")
</pallas_src>

<mosaic_0001>
module attributes {stable_mosaic.version = 11 : i64} {
  func.func @_rgbd2rgb_kernel(%arg0: i32, %arg1: i32, %arg2: memref<3x4xf32, #tpu.memory_space<smem>>, %arg3: memref<1x4x1x256xf32, #tpu.memory_space<vmem>>, %arg4: memref<1x3x1x256xf32, #tpu.memory_space<vmem>>) attributes {dimension_semantics = [#tpu.dimension_semantics<parallel>, #tpu.dimension_semantics<parallel>], iteration_bounds = array<i64: 2, 1>, scalar_prefetch = 0 : i64, scratch_operands = 0 : i64, tpu.core_type = #tpu.core_type<tc>, window_params = [{transform_indices = @transform_0, window_bounds = array<i64: 3, 4>}, {transform_indices = @transform_1, window_bounds = array<i64: 1, 4, 1, 256>}, {transform_indices = @transform_2, window_bounds = array<i64: 1, 3, 1, 256>}]} {
    %c0 = arith.constant 0 : index
    %c0_0 = arith.constant 0 : index
    %c0_1 = arith.constant 0 : index
    %c0_2 = arith.constant 0 : index
    %0 = vector.load %arg3[%c0, %c0_0, %c0_1, %c0_2] : memref<1x4x1x256xf32, #tpu.memory_space<vmem>>, vector<1x1x1x256xf32>
    %1 = vector.shape_cast %0 : vector<1x1x1x256xf32> to vector<1x256xf32>
    %c0_3 = arith.constant 0 : index
    %c1 = arith.constant 1 : index
    %c0_4 = arith.constant 0 : index
    %c0_5 = arith.constant 0 : index
    %2 = vector.load %arg3[%c0_3, %c1, %c0_4, %c0_5] : memref<1x4x1x256xf32, #tpu.memory_space<vmem>>, vector<1x1x1x256xf32>
    %3 = vector.shape_cast %2 : vector<1x1x1x256xf32> to vector<1x256xf32>
    %c0_6 = arith.constant 0 : index
    %c2 = arith.constant 2 : index
    %c0_7 = arith.constant 0 : index
    %c0_8 = arith.constant 0 : index
    %4 = vector.load %arg3[%c0_6, %c2, %c0_7, %c0_8] : memref<1x4x1x256xf32, #tpu.memory_space<vmem>>, vector<1x1x1x256xf32>
    %5 = vector.shape_cast %4 : vector<1x1x1x256xf32> to vector<1x256xf32>
    %c0_9 = arith.constant 0 : index
    %c3 = arith.constant 3 : index
    %c0_10 = arith.constant 0 : index
    %c0_11 = arith.constant 0 : index
    %6 = vector.load %arg3[%c0_9, %c3, %c0_10, %c0_11] : memref<1x4x1x256xf32, #tpu.memory_space<vmem>>, vector<1x1x1x256xf32>
    %7 = vector.shape_cast %6 : vector<1x1x1x256xf32> to vector<1x256xf32>
    %c0_12 = arith.constant 0 : index
    %c0_13 = arith.constant 0 : index
    %8 = memref.load %arg2[%c0_12, %c0_13] : memref<3x4xf32, #tpu.memory_space<smem>>
    %9 = vector.broadcast %8 : f32 to vector<1x256xf32>
    %10 = arith.mulf %9, %1 : vector<1x256xf32>
    %c0_14 = arith.constant 0 : index
    %c1_15 = arith.constant 1 : index
    %11 = memref.load %arg2[%c0_14, %c1_15] : memref<3x4xf32, #tpu.memory_space<smem>>
    %12 = vector.broadcast %11 : f32 to vector<1x256xf32>
    %13 = arith.mulf %12, %3 : vector<1x256xf32>
    %14 = arith.addf %10, %13 : vector<1x256xf32>
    %c0_16 = arith.constant 0 : index
    %c2_17 = arith.constant 2 : index
    %15 = memref.load %arg2[%c0_16, %c2_17] : memref<3x4xf32, #tpu.memory_space<smem>>
    %16 = vector.broadcast %15 : f32 to vector<1x256xf32>
    %17 = arith.mulf %16, %5 : vector<1x256xf32>
    %18 = arith.addf %14, %17 : vector<1x256xf32>
    %c0_18 = arith.constant 0 : index
    %c3_19 = arith.constant 3 : index
    %19 = memref.load %arg2[%c0_18, %c3_19] : memref<3x4xf32, #tpu.memory_space<smem>>
    %20 = vector.broadcast %19 : f32 to vector<1x256xf32>
    %21 = arith.mulf %20, %7 : vector<1x256xf32>
    %22 = arith.addf %18, %21 : vector<1x256xf32>
    %c0_20 = arith.constant 0 : index
    %c0_21 = arith.constant 0 : index
    %c0_22 = arith.constant 0 : index
    %c0_23 = arith.constant 0 : index
    %23 = vector.load %arg4[%c0_20, %c0_21, %c0_22, %c0_23] : memref<1x3x1x256xf32, #tpu.memory_space<vmem>>, vector<1x1x1x256xf32>
    %24 = vector.shape_cast %23 : vector<1x1x1x256xf32> to vector<1x256xf32>
    %25 = vector.shape_cast %22 : vector<1x256xf32> to vector<1x1x1x256xf32>
    tpu.vector_store %arg4[%c0_20, %c0_21, %c0_22, %c0_23], %25 {strides = array<i32>} : memref<1x3x1x256xf32, #tpu.memory_space<vmem>>, vector<1x1x1x256xf32>,
    %c1_24 = arith.constant 1 : index
    %c0_25 = arith.constant 0 : index
    %26 = memref.load %arg2[%c1_24, %c0_25] : memref<3x4xf32, #tpu.memory_space<smem>>
    %27 = vector.broadcast %26 : f32 to vector<1x256xf32>
    %28 = arith.mulf %27, %1 : vector<1x256xf32>
    %c1_26 = arith.constant 1 : index
    %c1_27 = arith.constant 1 : index
    %29 = memref.load %arg2[%c1_26, %c1_27] : memref<3x4xf32, #tpu.memory_space<smem>>
    %30 = vector.broadcast %29 : f32 to vector<1x256xf32>
    %31 = arith.mulf %30, %3 : vector<1x256xf32>
    %32 = arith.addf %28, %31 : vector<1x256xf32>
    %c1_28 = arith.constant 1 : index
    %c2_29 = arith.constant 2 : index
    %33 = memref.load %arg2[%c1_28, %c2_29] : memref<3x4xf32, #tpu.memory_space<smem>>
    %34 = vector.broadcast %33 : f32 to vector<1x256xf32>
    %35 = arith.mulf %34, %5 : vector<1x256xf32>
    %36 = arith.addf %32, %35 : vector<1x256xf32>
    %c1_30 = arith.constant 1 : index
    %c3_31 = arith.constant 3 : index
    %37 = memref.load %arg2[%c1_30, %c3_31] : memref<3x4xf32, #tpu.memory_space<smem>>
    %38 = vector.broadcast %37 : f32 to vector<1x256xf32>
    %39 = arith.mulf %38, %7 : vector<1x256xf32>
    %40 = arith.addf %36, %39 : vector<1x256xf32>
    %c0_32 = arith.constant 0 : index
    %c1_33 = arith.constant 1 : index
    %c0_34 = arith.constant 0 : index
    %c0_35 = arith.constant 0 : index
    %41 = vector.load %arg4[%c0_32, %c1_33, %c0_34, %c0_35] : memref<1x3x1x256xf32, #tpu.memory_space<vmem>>, vector<1x1x1x256xf32>
    %42 = vector.shape_cast %41 : vector<1x1x1x256xf32> to vector<1x256xf32>
    %43 = vector.shape_cast %40 : vector<1x256xf32> to vector<1x1x1x256xf32>
    tpu.vector_store %arg4[%c0_32, %c1_33, %c0_34, %c0_35], %43 {strides = array<i32>} : memref<1x3x1x256xf32, #tpu.memory_space<vmem>>, vector<1x1x1x256xf32>,
    %c2_36 = arith.constant 2 : index
    %c0_37 = arith.constant 0 : index
    %44 = memref.load %arg2[%c2_36, %c0_37] : memref<3x4xf32, #tpu.memory_space<smem>>
    %45 = vector.broadcast %44 : f32 to vector<1x256xf32>
    %46 = arith.mulf %45, %1 : vector<1x256xf32>
    %c2_38 = arith.constant 2 : index
    %c1_39 = arith.constant 1 : index
    %47 = memref.load %arg2[%c2_38, %c1_39] : memref<3x4xf32, #tpu.memory_space<smem>>
    %48 = vector.broadcast %47 : f32 to vector<1x256xf32>
    %49 = arith.mulf %48, %3 : vector<1x256xf32>
    %50 = arith.addf %46, %49 : vector<1x256xf32>
    %c2_40 = arith.constant 2 : index
    %c2_41 = arith.constant 2 : index
    %51 = memref.load %arg2[%c2_40, %c2_41] : memref<3x4xf32, #tpu.memory_space<smem>>
    %52 = vector.broadcast %51 : f32 to vector<1x256xf32>
    %53 = arith.mulf %52, %5 : vector<1x256xf32>
    %54 = arith.addf %50, %53 : vector<1x256xf32>
    %c2_42 = arith.constant 2 : index
    %c3_43 = arith.constant 3 : index
    %55 = memref.load %arg2[%c2_42, %c3_43] : memref<3x4xf32, #tpu.memory_space<smem>>
    %56 = vector.broadcast %55 : f32 to vector<1x256xf32>
    %57 = arith.mulf %56, %7 : vector<1x256xf32>
    %58 = arith.addf %54, %57 : vector<1x256xf32>
    %c0_44 = arith.constant 0 : index
    %c2_45 = arith.constant 2 : index
    %c0_46 = arith.constant 0 : index
    %c0_47 = arith.constant 0 : index
    %59 = vector.load %arg4[%c0_44, %c2_45, %c0_46, %c0_47] : memref<1x3x1x256xf32, #tpu.memory_space<vmem>>, vector<1x1x1x256xf32>
    %60 = vector.shape_cast %59 : vector<1x1x1x256xf32> to vector<1x256xf32>
    %61 = vector.shape_cast %58 : vector<1x256xf32> to vector<1x1x1x256xf32>
    tpu.vector_store %arg4[%c0_44, %c2_45, %c0_46, %c0_47], %61 {strides = array<i32>} : memref<1x3x1x256xf32, #tpu.memory_space<vmem>>, vector<1x1x1x256xf32>,
    return
  }
  func.func @transform_0(%arg0: i32, %arg1: i32) -> (i32, i32) {
    %c0_i32 = arith.constant 0 : i32
    %c0_i32_0 = arith.constant 0 : i32
    %c0_i32_1 = arith.constant 0 : i32
    return %c0_i32, %c0_i32_0 : i32, i32
  }
  func.func @transform_1(%arg0: i32, %arg1: i32) -> (i32, i32, i32, i32) {
    %c0_i32 = arith.constant 0 : i32
    %c0_i32_0 = arith.constant 0 : i32
    %c0_i32_1 = arith.constant 0 : i32
    return %arg0, %c0_i32, %arg1, %c0_i32_0 : i32, i32, i32, i32
  }
  func.func @transform_2(%arg0: i32, %arg1: i32) -> (i32, i32, i32, i32) {
    %c0_i32 = arith.constant 0 : i32
    %c0_i32_0 = arith.constant 0 : i32
    %c0_i32_1 = arith.constant 0 : i32
    return %arg0, %c0_i32, %arg1, %c0_i32_0 : i32, i32, i32, i32
  }
}

</mosaic_0001>

<llo_original>
// kernel: tpu_custom_call.1
$region0: #{tpu_custom_call.1}
  #allocation0 [shape = 'u32[]', space=smem, size = 0x4, offset = 0x4, fixed_abs, tag = 'smem constant byte address 0x4 - core index']
  #allocation1 [shape = 'u32[144,128]{1,0:T(1,128)}', space=vmem, size = 0x12000, scoped, tag = 'internal scratch']
  %s0 = inlined_call_operand.hbm [shape: f32[3,4], index: 0, kind: input, shape index: {}]
  %s1 = inlined_call_operand.hbm [shape: f32[2,4,1,256], index: 1, kind: input, shape index: {}]
  %s2 = inlined_call_operand.hbm [shape: f32[2,3,1,256], index: 2, kind: output, shape index: {}]
  %s3 = sld [smem:[#allocation0]]
  $region49: #{tpu_custom_call.1} parent=0
    _
  %s5 = ssub.s32 1, %s3
  %s6 = scalar_select 0, %s5, %s3
  $region1: #{tpu_custom_call.1} parent=0
    #allocation2 [shape = 'u8[2048]{0}', space=smem, size = 0x800, scoped, tag = 'input window, operand 0, single buffered']
    #allocation3 [shape = 's32[2]{0}', space=sflag, size = 0x8, scoped, tag = 'scoped memory for tpu_custom_call.1']
    #allocation4 [shape = 's32[2]{0}', space=sflag, size = 0x8, scoped, tag = 'scoped memory for tpu_custom_call.1']
    #allocation5 [shape = 's32[2]{0}', space=sflag, size = 0x8, scoped, tag = 'scoped memory for tpu_custom_call.1']
    #allocation6 [shape = 'u8[8192]{0}', space=vmem, size = 0x2000, scoped, tag = 'input window, operand 1']
    #allocation7 [shape = 'u8[6144]{0}', space=vmem, size = 0x1800, scoped, tag = 'output window, operand 0']
    %7 = vsyncpa [#allocation5], 0
    %8 = vsyncpa [#allocation3], 0
    %s9 = scalar_lea.sflag [#allocation3], 1
    %10 = vsyncpa %s9, 0
    %11 = vsyncpa [#allocation4], 0
    %s12 = scalar_lea.sflag [#allocation4], 1
    %13 = vsyncpa %s12, 0
    loop: start=0, step=1, limit=4
    $region2: #{tpu_custom_call.1} parent=1 // loop_pre_header
      _
    $region3: #{tpu_custom_call.1} parent=1 // loop_header
      %s15 = sphi 0, %s19
      %p16 = scmp.ge.s32.totalorder %s15, 4
      %s22 = sphi 0, %s34
      %s23 = sphi 0, %s30
      %s24 = sphi 0, %s22
      %s25 = sphi 0, %s23
      %s26 = sphi 0, %s24
      %s27 = sphi 0, %s25
      %s35 = sphi 0, %s35
      %s37 = sphi 0, %s35
      %s38 = sphi 0, %s37
      %s52 = sphi 0, %s38
      %s60 = sphi 0, %s62
      %s63 = sphi 0, %s60
      %s64 = sphi 0, %s63
      %s80 = sphi 0, %s64
      %s88 = sphi 0, %s90
      %s91 = sphi 0, %s88
      %s92 = sphi 0, %s91
      %s108 = sphi 0, %s92
    $region4: #{tpu_custom_call.1} parent=1 // loop_header_branch
      %18 = sbr.rel (%p16) target = $region8
    $region5: #{tpu_custom_call.1} parent=1 // loop_body
      %s20 = ssub.s32 %s15, 1
      %s21 = ssub.s32 %s15, 2
      %s28 = sadd.s32 1, %s23
      %p29 = scmp.ge.s32.totalorder %s28, 1
      %s30 = scalar_select %p29, 0, %s28
      %s31 = sadd.s32 1, %s22
      %s32 = scalar_select %p29, %s31, %s22
      %p33 = scmp.ge.s32.totalorder %s32, 2
      %s34 = scalar_select %p33, 0, %s32
      %s36 = sadd.s32 %s35, 1
      %p39 = scmp.eq.s32.totalorder %s15, 1
      %p40 = scmp.ne.s32.totalorder %s35, %s37
      %p41 = scmp.eq.s32.totalorder %s15, 0
      %p42 = por %p40, %p41
      %p43 = scmp.ne.s32.totalorder %s35, %s37
      %p44 = scmp.eq.s32.totalorder %s20, 1
      %p45 = por %p43, %p44
      %p46 = scmp.ne.s32.totalorder %s37, %s38
      %p47 = scmp.eq.s32.totalorder %s20, 0
      %p48 = por %p46, %p47
      %p49 = scmp.ne.s32.totalorder %s37, %s38
      %p50 = scmp.eq.s32.totalorder %s21, 1
      %p51 = por %p49, %p50
      %p53 = scmp.ne.s32.totalorder %s38, %s52
      %p54 = scmp.eq.s32.totalorder %s21, 0
      %p55 = por %p53, %p54
      %s56 = ssub.s32 %s22, %s34
      %s57 = ssub.s32 %s23, %s30
      %s58 = sor.u32 %s56, %s57
      %p59 = scmp.eq.s32.totalorder %s58, 0
      %s61 = sadd.s32 %s60, 1
      %s62 = scalar_select %p59, %s60, %s61
      %p65 = pneg %p59
      %p66 = scmp.eq.s32.totalorder %s15, 1
      %p67 = por %p65, %p66
      %p68 = scmp.ne.s32.totalorder %s60, %s63
      %p69 = scmp.eq.s32.totalorder %s15, 0
      %p70 = por %p68, %p69
      %p71 = scmp.ne.s32.totalorder %s60, %s63
      %p72 = scmp.eq.s32.totalorder %s20, 1
      %p73 = por %p71, %p72
      %p74 = scmp.ne.s32.totalorder %s63, %s64
      %p75 = scmp.eq.s32.totalorder %s20, 0
      %p76 = por %p74, %p75
      %p77 = scmp.ne.s32.totalorder %s63, %s64
      %p78 = scmp.eq.s32.totalorder %s21, 1
      %p79 = por %p77, %p78
      %p81 = scmp.ne.s32.totalorder %s64, %s80
      %p82 = scmp.eq.s32.totalorder %s21, 0
      %p83 = por %p81, %p82
      %s84 = ssub.s32 %s22, %s34
      %s85 = ssub.s32 %s23, %s30
      %s86 = sor.u32 %s84, %s85
      %p87 = scmp.eq.s32.totalorder %s86, 0
      %s89 = sadd.s32 %s88, 1
      %s90 = scalar_select %p87, %s88, %s89
      %p93 = pneg %p87
      %p94 = scmp.eq.s32.totalorder %s15, 1
      %p95 = por %p93, %p94
      %p96 = scmp.ne.s32.totalorder %s88, %s91
      %p97 = scmp.eq.s32.totalorder %s15, 0
      %p98 = por %p96, %p97
      %p99 = scmp.ne.s32.totalorder %s88, %s91
      %p100 = scmp.eq.s32.totalorder %s20, 1
      %p101 = por %p99, %p100
      %p102 = scmp.ne.s32.totalorder %s91, %s92
      %p103 = scmp.eq.s32.totalorder %s20, 0
      %p104 = por %p102, %p103
      %p105 = scmp.ne.s32.totalorder %s91, %s92
      %p106 = scmp.eq.s32.totalorder %s21, 1
      %p107 = por %p105, %p106
      %p109 = scmp.ne.s32.totalorder %s92, %s108
      %p110 = scmp.eq.s32.totalorder %s21, 0
      %p111 = por %p109, %p110
      %p112 = scmp.le.s32.totalorder 1, %s15
      %p113 = scmp.lt.s32.totalorder %s15, 3
      %p114 = pnand %p112, %p113
      %p115 = pneg %p114
      // Predicated region
      $region9: #{tpu_custom_call.1} parent=5 // pred_check
        _
      $region10: #{tpu_custom_call.1} parent=5 // pred_check_branch
        %117 = sbr.rel (%p114) target = $region12
      $region11: #{tpu_custom_call.1} parent=5 // pred_region
        %s118 = ssub.s32 %s15, 1
        // Predicated region
        $region13: #{tpu_custom_call.1} parent=11 // pred_check
          %p119 = pneg %p48
        $region14: #{tpu_custom_call.1} parent=11 // pred_check_branch
          %121 = sbr.rel (%p119) target = $region16
        $region15: #{tpu_custom_call.1} parent=11 // pred_region
          %s123 = ssub.s32 64, 64
          %124 = vsyncadd [#allocation5], %s123
          %127 = dma.hbm_to_smem %s0, 64, [#allocation2], [#allocation5]
        $region16: #{tpu_custom_call.1} parent=11 // pred_fallthru
          _
      $region12: #{tpu_custom_call.1} parent=5 // pred_fallthru
        _
      %p128 = scmp.lt.s32.totalorder %s15, 2
      // Predicated region
      $region17: #{tpu_custom_call.1} parent=5 // pred_check
        %p129 = pneg %p128
      $region18: #{tpu_custom_call.1} parent=5 // pred_check_branch
        %131 = sbr.rel (%p129) target = $region20
      $region19: #{tpu_custom_call.1} parent=5 // pred_region
        // Predicated region
        $region21: #{tpu_custom_call.1} parent=19 // pred_check
          %p132 = pneg %p70
        $region22: #{tpu_custom_call.1} parent=19 // pred_check_branch
          %134 = sbr.rel (%p132) target = $region24
        $region23: #{tpu_custom_call.1} parent=19 // pred_region
          %s135 = sand.u32 %s60, 1
          %s136 = scalar_lea.sflag [#allocation3], %s135
          %s137 = sand.u32 %s60, 1
          %s138 = smul.addr %s137, 8
          %s139 = scalar_lea.vmem [#allocation6], %s138
          %s141 = ssub.s32 128, 128
          %142 = vsyncadd %s136, %s141
          %s143 = smul.addr %s23, 2
          %s144 = smul.addr %s22, 8
          %s145 = sadd.s32 %s143, %s144
          %s146 = smul.addr %s145, 16
          %s147 = scalar_lea.hbm %s1, %s146
          %s148 = sshll.u32 %s139, 4
          %s149 = int_to_ptr.vmem [resolvable:$true] %s148
          %154 = dma.hbm_to_vmem [thread:$0]  %s147, 128, %s149, %s136, 32, 32, 2
        $region24: #{tpu_custom_call.1} parent=19 // pred_fallthru
          _
      $region20: #{tpu_custom_call.1} parent=5 // pred_fallthru
        _
      %p155 = scmp.le.s32.totalorder 1, %s15
      %p156 = scmp.lt.s32.totalorder %s15, 3
      %p157 = pnand %p155, %p156
      %p158 = pneg %p157
      // Predicated region
      $region25: #{tpu_custom_call.1} parent=5 // pred_check
        _
      $region26: #{tpu_custom_call.1} parent=5 // pred_check_branch
        %160 = sbr.rel (%p157) target = $region28
      $region27: #{tpu_custom_call.1} parent=5 // pred_region
        %s161 = ssub.s32 %s15, 1
        // Predicated region
        $region29: #{tpu_custom_call.1} parent=27 // pred_check
          %p162 = pneg %p48
        $region30: #{tpu_custom_call.1} parent=27 // pred_check_branch
          %164 = sbr.rel (%p162) target = $region32
        $region31: #{tpu_custom_call.1} parent=27 // pred_region
          %165 = dma.done [#allocation5], 64
        $region32: #{tpu_custom_call.1} parent=27 // pred_fallthru
          _
        %s166 = sand.u32 %s63, 1
        %s167 = scalar_lea.sflag [#allocation3], %s166
        %s168 = sand.u32 %s63, 1
        %s169 = smul.addr %s168, 8
        %s170 = scalar_lea.vmem [#allocation6], %s169
        // Predicated region
        $region33: #{tpu_custom_call.1} parent=27 // pred_check
          %p171 = pneg %p76
        $region34: #{tpu_custom_call.1} parent=27 // pred_check_branch
          %173 = sbr.rel (%p171) target = $region36
        $region35: #{tpu_custom_call.1} parent=27 // pred_region
          %174 = dma.done %s167, 128
        $region36: #{tpu_custom_call.1} parent=27 // pred_fallthru
          _
        %175 = sfence
        %p176 = pneg %p48
        %p177 = pneg %p45
        %s178 = sand.u32 %s63, 1
        %s179 = scalar_lea.sflag [#allocation3], %s178
        %s180 = sand.u32 %s63, 1
        %s181 = smul.addr %s180, 8
        %s182 = scalar_lea.vmem [#allocation6], %s181
        %p183 = pneg %p76
        %p184 = pneg %p73
        %p185 = pneg %p104
        %p186 = pneg %p101
        %s187 = sand.u32 %s91, 1
        %s188 = scalar_lea.sflag [#allocation4], %s187
        %s189 = sand.u32 %s91, 1
        %s190 = smul.addr %s189, 6
        %s191 = scalar_lea.vmem [#allocation7], %s190
        %v192 = vld [vmem:[%s170] sm:$0x3]
        %s193 = scalar_lea.vmem %s170, 2 [#allocation6]
        %v194 = vld [vmem:[%s193] sm:$0x3]
        %s195 = scalar_lea.vmem %s170, 4 [#allocation6]
        %v196 = vld [vmem:[%s195] sm:$0x3]
        %s197 = scalar_lea.vmem %s170, 6 [#allocation6]
        %v198 = vld [vmem:[%s197] sm:$0x3]
        %s199 = sld [smem:[#allocation2]]
        %v200 = vstv %s199
        %v201 = vmul.f32 %v200, %v192
        %s202 = sld [smem:[#allocation2 + $0x1]]
        %v203 = vstv %s202
        %v204 = vmul.f32 %v203, %v194
        %v205 = vadd.f32 %v201, %v204
        %s206 = sld [smem:[#allocation2 + $0x2]]
        %v207 = vstv %s206
        %v208 = vmul.f32 %v207, %v196
        %v209 = vadd.f32 %v205, %v208
        %s210 = sld [smem:[#allocation2 + $0x3]]
        %v211 = vstv %s210
        %v212 = vmul.f32 %v211, %v198
        %v213 = vadd.f32 %v209, %v212
        %v214 = vlaneseq
        %vm215 = vcmp.ge.s32.totalorder %v214, 0
        %vm216 = vcmp.lt.s32.totalorder %v214, 256
        %vm217 = vmand %vm215, %vm216
        %218 = vst.msk [vmem:[%s191] sm:$0x3] %vm217, %v213
        %s219 = sld [smem:[#allocation2 + $0x80]]
        %v220 = vstv %s219
        %v221 = vmul.f32 %v220, %v192
        %s222 = sld [smem:[#allocation2 + $0x81]]
        %v223 = vstv %s222
        %v224 = vmul.f32 %v223, %v194
        %v225 = vadd.f32 %v221, %v224
        %s226 = sld [smem:[#allocation2 + $0x82]]
        %v227 = vstv %s226
        %v228 = vmul.f32 %v227, %v196
        %v229 = vadd.f32 %v225, %v228
        %s230 = sld [smem:[#allocation2 + $0x83]]
        %v231 = vstv %s230
        %v232 = vmul.f32 %v231, %v198
        %v233 = vadd.f32 %v229, %v232
        %s234 = scalar_lea.vmem %s191, 2 [#allocation7]
        %235 = vst.msk [vmem:[%s234] sm:$0x3] %vm217, %v233
        %s236 = sld [smem:[#allocation2 + $0x100]]
        %v237 = vstv %s236
        %v238 = vmul.f32 %v237, %v192
        %s239 = sld [smem:[#allocation2 + $0x101]]
        %v240 = vstv %s239
        %v241 = vmul.f32 %v240, %v194
        %v242 = vadd.f32 %v238, %v241
        %s243 = sld [smem:[#allocation2 + $0x102]]
        %v244 = vstv %s243
        %v245 = vmul.f32 %v244, %v196
        %v246 = vadd.f32 %v242, %v245
        %s247 = sld [smem:[#allocation2 + $0x103]]
        %v248 = vstv %s247
        %v249 = vmul.f32 %v248, %v198
        %v250 = vadd.f32 %v246, %v249
        %s251 = scalar_lea.vmem %s191, 4 [#allocation7]
        %252 = vst.msk [vmem:[%s251] sm:$0x3] %vm217, %v250
        %s253 = sand.u32 %s91, 1
        %s254 = scalar_lea.sflag [#allocation4], %s253
        %s255 = sand.u32 %s91, 1
        %s256 = smul.addr %s255, 6
        %s257 = scalar_lea.vmem [#allocation7], %s256
        // Predicated region
        $region37: #{tpu_custom_call.1} parent=27 // pred_check
          %p258 = pneg %p101
        $region38: #{tpu_custom_call.1} parent=27 // pred_check_branch
          %260 = sbr.rel (%p258) target = $region40
        $region39: #{tpu_custom_call.1} parent=27 // pred_region
          %s262 = ssub.s32 96, 96
          %263 = vsyncadd %s254, %s262
          %s264 = smul.addr %s25, 2
          %s265 = smul.addr %s24, 6
          %s266 = sadd.s32 %s264, %s265
          %s267 = smul.addr %s266, 16
          %s268 = scalar_lea.hbm %s2, %s267
          %s269 = sshll.u32 %s257, 4
          %s270 = int_to_ptr.vmem [resolvable:$true] %s269
          %275 = dma.vmem_to_hbm [thread:$0]  %s270, 96, %s268, %s254, 32, 32, 2
        $region40: #{tpu_custom_call.1} parent=27 // pred_fallthru
          _
      $region28: #{tpu_custom_call.1} parent=5 // pred_fallthru
        _
      %p276 = scmp.le.s32.totalorder 2, %s15
      // Predicated region
      $region41: #{tpu_custom_call.1} parent=5 // pred_check
        %p277 = pneg %p276
      $region42: #{tpu_custom_call.1} parent=5 // pred_check_branch
        %279 = sbr.rel (%p277) target = $region44
      $region43: #{tpu_custom_call.1} parent=5 // pred_region
        %s280 = ssub.s32 %s15, 2
        // Predicated region
        $region45: #{tpu_custom_call.1} parent=43 // pred_check
          %p281 = pneg %p107
        $region46: #{tpu_custom_call.1} parent=43 // pred_check_branch
          %283 = sbr.rel (%p281) target = $region48
        $region47: #{tpu_custom_call.1} parent=43 // pred_region
          %s284 = sand.u32 %s92, 1
          %s285 = scalar_lea.sflag [#allocation4], %s284
          %s286 = sand.u32 %s92, 1
          %s287 = smul.addr %s286, 6
          %s288 = scalar_lea.vmem [#allocation7], %s287
          %289 = dma.done %s285, 96
        $region48: #{tpu_custom_call.1} parent=43 // pred_fallthru
          _
      $region44: #{tpu_custom_call.1} parent=5 // pred_fallthru
        _
    $region6: #{tpu_custom_call.1} parent=1 // loop_footer
      %s19 = sadd.s32 1, %s15
    $region7: #{tpu_custom_call.1} parent=1 // loop_footer_branch
      %14 = sbr.rel target = $region3
    $region8: #{tpu_custom_call.1} parent=1 // loop_exit
      _
    %290 = vsyncpa [#allocation3], 1
    %s291 = scalar_lea.sflag [#allocation3], 1
    %292 = vsyncpa %s291, 1
    %293 = vsyncpa [#allocation4], 1
    %s294 = scalar_lea.sflag [#allocation4], 1
    %295 = vsyncpa %s294, 1
    %296 = vsyncpa [#allocation5], 1
    %s297 = scalar_lea.sflag [#allocation5], 1
    %298 = vsyncpa %s297, 1

</llo_original>
